<compile_context>
chip_gen: v5e
topology: v5e:2x2
jax: 0.10.0
libtpu: 0.0.40
codegen_flags: <defaults>
</compile_context>

<pallas_src>
import math
from functools import partial

import jax
import jax.numpy as jnp
from jax.experimental import pallas as pl
from jax.experimental.pallas import tpu as pltpu

EPS = 1e-5


def _round_up(a, b):
    return (a + b - 1) // b * b


def _bn_fused_kernel(x_ref, gamma_ref, beta_ref, o_ref, scale_ref, shift_ref,
                     *, n_rows, tile_n, mask_rows):
    """Fused BatchNorm1d forward.

    grid = (2, n_tiles):
      p == 0: accumulate per-channel sum/sumsq over row tiles; at the last
              tile fold gamma/beta into (scale, shift) held in VMEM scratch.
      p == 1: y = x * scale + shift, written tile by tile.
    """
    p = pl.program_id(0)              # 0 = stats pass, 1 = normalize pass
    i = pl.program_id(1)              # row-tile index
    last = pl.num_programs(1) - 1

    @pl.when((p == 0) & (i == 0))
    def _():
        scale_ref[...] = jnp.zeros_like(scale_ref)   # running sum
        shift_ref[...] = jnp.zeros_like(shift_ref)   # running sumsq

    @pl.when(p == 0)
    def _():
        x = x_ref[...].astype(jnp.float32)
        if mask_rows:
            # Ragged last tile: rows >= n_rows hold unspecified data from the
            # out-of-bounds block read -> zero them before accumulating.
            row = jax.lax.broadcasted_iota(jnp.int32, x.shape, 0)
            x = jnp.where(row < (n_rows - i * tile_n), x, 0.0)
        scale_ref[...] += jnp.sum(x, axis=0, keepdims=True)
        shift_ref[...] += jnp.sum(x * x, axis=0, keepdims=True)

    @pl.when((p == 0) & (i == last))
    def _():
        inv_n = jnp.float32(1.0 / n_rows)
        mean = scale_ref[...] * inv_n                                 # (1, D)
        var = jnp.maximum(shift_ref[...] * inv_n - mean * mean, 0.0)  # biased
        inv_std = jax.lax.rsqrt(var + jnp.float32(EPS))
        s = gamma_ref[...] * inv_std
        scale_ref[...] = s
        shift_ref[...] = beta_ref[...] - mean * s

    @pl.when(p == 1)
    def _():
        x = x_ref[...].astype(jnp.float32)
        o_ref[...] = (x * scale_ref[...] + shift_ref[...]).astype(o_ref.dtype)


def normalization_batch(x, gamma, beta, *, max_tile_rows=None):
    """BatchNorm1d over the last dim of x (any leading dims), training stats."""
    orig_shape = x.shape
    D = orig_shape[-1]
    x2 = x.reshape(-1, D)
    N = x2.shape[0]

    itemsize = jnp.dtype(x.dtype).itemsize
    # dtype-aware sublane multiple: f32 -> 8, bf16/f16 -> 16, int8/fp8 -> 32.
    sublane = {4: 8, 2: 16, 1: 32}.get(itemsize, 8)

    # Byte-based row-tile sizing: ~4 MiB of x per tile.  Live VMEM is roughly
    # 2 double-buffered x tiles + 2 double-buffered output tiles + tiny
    # gamma/beta/scratch rows ~= 4 * 4 MiB = 16 MiB, well under the 32 MiB
    # scoped limit we request (safe on v5e / v6e / v7x).
    target_tile_bytes = 4 * 1024 * 1024
    bytes_per_row = D * itemsize
    tile_n = max(sublane,
                 (target_tile_bytes // bytes_per_row) // sublane * sublane)
    if max_tile_rows is not None:
        tile_n = min(tile_n, max(sublane, _round_up(max_tile_rows, sublane)))
    tile_n = min(tile_n, _round_up(N, sublane))
    n_tiles = pl.cdiv(N, tile_n)
    mask_rows = (N % tile_n) != 0

    g2 = gamma.reshape(1, D).astype(jnp.float32)
    b2 = beta.reshape(1, D).astype(jnp.float32)

    kernel = partial(_bn_fused_kernel, n_rows=N, tile_n=tile_n,
                     mask_rows=mask_rows)

    out = pl.pallas_call(
        kernel,
        out_shape=jax.ShapeDtypeStruct((N, D), x.dtype),
        grid_spec=pltpu.PrefetchScalarGridSpec(
            num_scalar_prefetch=0,
            grid=(2, n_tiles),
            in_specs=[
                # Full-D blocks (block dim == array dim) -> no lane padding.
                pl.BlockSpec((tile_n, D), lambda p, i: (i, 0)),
                pl.BlockSpec((1, D), lambda p, i: (0, 0)),
                pl.BlockSpec((1, D), lambda p, i: (0, 0)),
            ],
            # During the stats pass (p==0) park the output on block 0 (never
            # written there); during the normalize pass (p==1) it tracks i.
            # Each output block is thus visited in one consecutive run and
            # fully written exactly once.
            out_specs=pl.BlockSpec((tile_n, D), lambda p, i: (p * i, 0)),
            scratch_shapes=[
                pltpu.VMEM((1, D), jnp.float32),   # sum  -> scale
                pltpu.VMEM((1, D), jnp.float32),   # sumsq -> shift
            ]),
        compiler_params=pltpu.CompilerParams(
            dimension_semantics=("arbitrary", "arbitrary"),
            vmem_limit_bytes=32 * 1024 * 1024),
    )(x2, g2, b2)

    return out.reshape(orig_shape)


def _reference(x, gamma, beta):
    x2 = x.reshape(-1, x.shape[-1]).astype(jnp.float32)
    mean = jnp.mean(x2, axis=0, keepdims=True)
    var = jnp.mean((x2 - mean) ** 2, axis=0, keepdims=True)
    y = (x2 - mean) / jnp.sqrt(var + EPS) * gamma + beta
    return y.reshape(x.shape).astype(x.dtype)


def _check(x, gamma, beta, **kw):
    y = normalization_batch(x, gamma, beta, **kw)
    jax.block_until_ready(y)
    y_ref = _reference(x, gamma, beta)
    assert jnp.allclose(y, y_ref, atol=1e-5, rtol=1e-5), "mismatch vs reference"


if __name__ == "__main__":
    key = jax.random.PRNGKey(0)
    kx1, kx2, kx3, kg, kb = jax.random.split(key, 5)

    # Small shapes implied by the forward: (batch, seq, embed_dim).
    D = 32
    # Deterministic parameter init mimicking init_parameters():
    # uniform(-stdv, stdv) with stdv = 1/sqrt(embed_dim).
    stdv = 1.0 / math.sqrt(D)
    gamma = jax.random.uniform(kg, (D,), minval=-stdv, maxval=stdv,
                               dtype=jnp.float32)
    beta = jax.random.uniform(kb, (D,), minval=-stdv, maxval=stdv,
                              dtype=jnp.float32)

    # 1) Base case: (2, 8, 32), single tile, no ragged rows.
    x1 = jax.random.normal(kx1, (2, 8, D), dtype=jnp.float32)
    _check(x1, gamma, beta)

    # 2) Ragged row count (N=21 not a multiple of 8) -> exercises the in-kernel
    #    row mask instead of wrapper padding.
    x2 = jax.random.normal(kx2, (3, 7, D), dtype=jnp.float32)
    _check(x2, gamma, beta)

    # 3) Multi-tile + ragged last tile (N=60, forced 16-row tiles) -> exercises
    #    cross-tile accumulation and the pass-aware output index map.
    x3 = jax.random.normal(kx3, (4, 15, D), dtype=jnp.float32)
    _check(x3, gamma, beta, max_tile_rows=16)

    print("KERNEL_OK")
</pallas_src>

<mosaic_0001>
module attributes {stable_mosaic.version = 11 : i64} {
  func.func @_bn_fused_kernel(%arg0: i32, %arg1: i32, %arg2: memref<16x32xf32, #tpu.memory_space<vmem>>, %arg3: memref<1x32xf32, #tpu.memory_space<vmem>>, %arg4: memref<1x32xf32, #tpu.memory_space<vmem>>, %arg5: memref<16x32xf32, #tpu.memory_space<vmem>>, %arg6: memref<1x32xf32, #tpu.memory_space<vmem>>, %arg7: memref<1x32xf32, #tpu.memory_space<vmem>>) attributes {dimension_semantics = [#tpu.dimension_semantics<arbitrary>, #tpu.dimension_semantics<arbitrary>], iteration_bounds = array<i64: 2, 1>, scalar_prefetch = 0 : i64, scratch_operands = 2 : i64, tpu.core_type = #tpu.core_type<tc>, window_params = [{transform_indices = @transform_0, window_bounds = array<i64: 16, 32>}, {pipeline_mode = #tpu.pipeline_mode<synchronous>, transform_indices = @transform_1, window_bounds = array<i64: 1, 32>}, {pipeline_mode = #tpu.pipeline_mode<synchronous>, transform_indices = @transform_2, window_bounds = array<i64: 1, 32>}, {transform_indices = @transform_3, window_bounds = array<i64: 16, 32>}]} {
    %c0_i32 = arith.constant 0 : i32
    %0 = arith.cmpi eq, %arg0, %c0_i32 : i32
    %c0_i32_0 = arith.constant 0 : i32
    %1 = arith.cmpi eq, %arg1, %c0_i32_0 : i32
    %2 = arith.andi %0, %1 : i1
    %3 = arith.extui %2 : i1 to i32
    %c0_i32_1 = arith.constant 0 : i32
    %4 = arith.cmpi ne, %3, %c0_i32_1 : i32
    scf.if %4 {
      %cst = arith.constant 0.000000e+00 : f32
      %16 = vector.broadcast %cst : f32 to vector<1x32xf32>
      %c0 = arith.constant 0 : index
      %c0_8 = arith.constant 0 : index
      %17 = vector.load %arg6[%c0, %c0_8] : memref<1x32xf32, #tpu.memory_space<vmem>>, vector<1x32xf32>
      tpu.vector_store %arg6[%c0, %c0_8], %16 {strides = array<i32>} : memref<1x32xf32, #tpu.memory_space<vmem>>, vector<1x32xf32>,
      %cst_9 = arith.constant 0.000000e+00 : f32
      %18 = vector.broadcast %cst_9 : f32 to vector<1x32xf32>
      %c0_10 = arith.constant 0 : index
      %c0_11 = arith.constant 0 : index
      %19 = vector.load %arg7[%c0_10, %c0_11] : memref<1x32xf32, #tpu.memory_space<vmem>>, vector<1x32xf32>
      tpu.vector_store %arg7[%c0_10, %c0_11], %18 {strides = array<i32>} : memref<1x32xf32, #tpu.memory_space<vmem>>, vector<1x32xf32>,
    } else {
    }
    %c0_i32_2 = arith.constant 0 : i32
    %5 = arith.cmpi eq, %arg0, %c0_i32_2 : i32
    %6 = arith.extui %5 : i1 to i32
    %c0_i32_3 = arith.constant 0 : i32
    %7 = arith.cmpi ne, %6, %c0_i32_3 : i32
    scf.if %7 {
      %c0 = arith.constant 0 : index
      %c0_8 = arith.constant 0 : index
      %16 = vector.load %arg2[%c0, %c0_8] : memref<16x32xf32, #tpu.memory_space<vmem>>, vector<16x32xf32>
      %c0_9 = arith.constant 0 : index
      %c0_10 = arith.constant 0 : index
      %17 = vector.load %arg6[%c0_9, %c0_10] : memref<1x32xf32, #tpu.memory_space<vmem>>, vector<1x32xf32>
      %cst = arith.constant dense<0.000000e+00> : vector<32xf32>
      %18 = vector.multi_reduction <add>, %16, %cst [0] : vector<16x32xf32> to vector<32xf32>
      %19 = vector.shape_cast %18 : vector<32xf32> to vector<1x32xf32>
      %20 = arith.addf %17, %19 : vector<1x32xf32>
      %c0_11 = arith.constant 0 : index
      %c0_12 = arith.constant 0 : index
      %21 = vector.load %arg6[%c0_11, %c0_12] : memref<1x32xf32, #tpu.memory_space<vmem>>, vector<1x32xf32>
      tpu.vector_store %arg6[%c0_11, %c0_12], %20 {strides = array<i32>} : memref<1x32xf32, #tpu.memory_space<vmem>>, vector<1x32xf32>,
      %c0_13 = arith.constant 0 : index
      %c0_14 = arith.constant 0 : index
      %22 = vector.load %arg7[%c0_13, %c0_14] : memref<1x32xf32, #tpu.memory_space<vmem>>, vector<1x32xf32>
      %23 = arith.mulf %16, %16 : vector<16x32xf32>
      %cst_15 = arith.constant dense<0.000000e+00> : vector<32xf32>
      %24 = vector.multi_reduction <add>, %23, %cst_15 [0] : vector<16x32xf32> to vector<32xf32>
      %25 = vector.shape_cast %24 : vector<32xf32> to vector<1x32xf32>
      %26 = arith.addf %22, %25 : vector<1x32xf32>
      %c0_16 = arith.constant 0 : index
      %c0_17 = arith.constant 0 : index
      %27 = vector.load %arg7[%c0_16, %c0_17] : memref<1x32xf32, #tpu.memory_space<vmem>>, vector<1x32xf32>
      tpu.vector_store %arg7[%c0_16, %c0_17], %26 {strides = array<i32>} : memref<1x32xf32, #tpu.memory_space<vmem>>, vector<1x32xf32>,
    } else {
    }
    %c0_i32_4 = arith.constant 0 : i32
    %8 = arith.cmpi eq, %arg0, %c0_i32_4 : i32
    %c0_i32_5 = arith.constant 0 : i32
    %9 = arith.cmpi eq, %arg1, %c0_i32_5 : i32
    %10 = arith.andi %8, %9 : i1
    %11 = arith.extui %10 : i1 to i32
    %c0_i32_6 = arith.constant 0 : i32
    %12 = arith.cmpi ne, %11, %c0_i32_6 : i32
    scf.if %12 {
      %c0 = arith.constant 0 : index
      %c0_8 = arith.constant 0 : index
      %16 = vector.load %arg6[%c0, %c0_8] : memref<1x32xf32, #tpu.memory_space<vmem>>, vector<1x32xf32>
      %cst = arith.constant 6.250000e-02 : f32
      %17 = vector.broadcast %cst : f32 to vector<1x32xf32>
      %18 = arith.mulf %16, %17 : vector<1x32xf32>
      %c0_9 = arith.constant 0 : index
      %c0_10 = arith.constant 0 : index
      %19 = vector.load %arg7[%c0_9, %c0_10] : memref<1x32xf32, #tpu.memory_space<vmem>>, vector<1x32xf32>
      %cst_11 = arith.constant 6.250000e-02 : f32
      %20 = vector.broadcast %cst_11 : f32 to vector<1x32xf32>
      %21 = arith.mulf %19, %20 : vector<1x32xf32>
      %22 = arith.mulf %18, %18 : vector<1x32xf32>
      %23 = arith.subf %21, %22 : vector<1x32xf32>
      %cst_12 = arith.constant 0.000000e+00 : f32
      %24 = vector.broadcast %cst_12 : f32 to vector<1x32xf32>
      %25 = arith.maximumf %23, %24 : vector<1x32xf32>
      %cst_13 = arith.constant 9.99999974E-6 : f32
      %26 = vector.broadcast %cst_13 : f32 to vector<1x32xf32>
      %27 = arith.addf %25, %26 : vector<1x32xf32>
      %28 = math.rsqrt %27 : vector<1x32xf32>
      %c0_14 = arith.constant 0 : index
      %c0_15 = arith.constant 0 : index
      %29 = vector.load %arg3[%c0_14, %c0_15] : memref<1x32xf32, #tpu.memory_space<vmem>>, vector<1x32xf32>
      %30 = arith.mulf %29, %28 : vector<1x32xf32>
      %c0_16 = arith.constant 0 : index
      %c0_17 = arith.constant 0 : index
      %31 = vector.load %arg6[%c0_16, %c0_17] : memref<1x32xf32, #tpu.memory_space<vmem>>, vector<1x32xf32>
      tpu.vector_store %arg6[%c0_16, %c0_17], %30 {strides = array<i32>} : memref<1x32xf32, #tpu.memory_space<vmem>>, vector<1x32xf32>,
      %c0_18 = arith.constant 0 : index
      %c0_19 = arith.constant 0 : index
      %32 = vector.load %arg4[%c0_18, %c0_19] : memref<1x32xf32, #tpu.memory_space<vmem>>, vector<1x32xf32>
      %33 = arith.mulf %18, %30 : vector<1x32xf32>
      %34 = arith.subf %32, %33 : vector<1x32xf32>
      %c0_20 = arith.constant 0 : index
      %c0_21 = arith.constant 0 : index
      %35 = vector.load %arg7[%c0_20, %c0_21] : memref<1x32xf32, #tpu.memory_space<vmem>>, vector<1x32xf32>
      tpu.vector_store %arg7[%c0_20, %c0_21], %34 {strides = array<i32>} : memref<1x32xf32, #tpu.memory_space<vmem>>, vector<1x32xf32>,
    } else {
    }
    %c1_i32 = arith.constant 1 : i32
    %13 = arith.cmpi eq, %arg0, %c1_i32 : i32
    %14 = arith.extui %13 : i1 to i32
    %c0_i32_7 = arith.constant 0 : i32
    %15 = arith.cmpi ne, %14, %c0_i32_7 : i32
    scf.if %15 {
      %c0 = arith.constant 0 : index
      %c0_8 = arith.constant 0 : index
      %16 = vector.load %arg2[%c0, %c0_8] : memref<16x32xf32, #tpu.memory_space<vmem>>, vector<16x32xf32>
      %c0_9 = arith.constant 0 : index
      %c0_10 = arith.constant 0 : index
      %17 = vector.load %arg6[%c0_9, %c0_10] : memref<1x32xf32, #tpu.memory_space<vmem>>, vector<1x32xf32>
      %18 = vector.broadcast %17 : vector<1x32xf32> to vector<16x32xf32>
      %19 = arith.mulf %16, %18 : vector<16x32xf32>
      %c0_11 = arith.constant 0 : index
      %c0_12 = arith.constant 0 : index
      %20 = vector.load %arg7[%c0_11, %c0_12] : memref<1x32xf32, #tpu.memory_space<vmem>>, vector<1x32xf32>
      %21 = vector.broadcast %20 : vector<1x32xf32> to vector<16x32xf32>
      %22 = arith.addf %19, %21 : vector<16x32xf32>
      %c0_13 = arith.constant 0 : index
      %c0_14 = arith.constant 0 : index
      %23 = vector.load %arg5[%c0_13, %c0_14] : memref<16x32xf32, #tpu.memory_space<vmem>>, vector<16x32xf32>
      tpu.vector_store %arg5[%c0_13, %c0_14], %22 {strides = array<i32>} : memref<16x32xf32, #tpu.memory_space<vmem>>, vector<16x32xf32>,
    } else {
    }
    return
  }
  func.func @transform_0(%arg0: i32, %arg1: i32) -> (i32, i32) {
    %c0_i32 = arith.constant 0 : i32
    %c0_i32_0 = arith.constant 0 : i32
    return %arg1, %c0_i32 : i32, i32
  }
  func.func @transform_1(%arg0: i32, %arg1: i32) -> (i32, i32) {
    %c0_i32 = arith.constant 0 : i32
    %c0_i32_0 = arith.constant 0 : i32
    %c0_i32_1 = arith.constant 0 : i32
    return %c0_i32, %c0_i32_0 : i32, i32
  }
  func.func @transform_2(%arg0: i32, %arg1: i32) -> (i32, i32) {
    %c0_i32 = arith.constant 0 : i32
    %c0_i32_0 = arith.constant 0 : i32
    %c0_i32_1 = arith.constant 0 : i32
    return %c0_i32, %c0_i32_0 : i32, i32
  }
  func.func @transform_3(%arg0: i32, %arg1: i32) -> (i32, i32) {
    %0 = arith.muli %arg0, %arg1 : i32
    %c0_i32 = arith.constant 0 : i32
    %c0_i32_0 = arith.constant 0 : i32
    return %0, %c0_i32 : i32, i32
  }
}

</mosaic_0001>

<llo_original>
// kernel: tpu_custom_call.1
$region0: #{tpu_custom_call.1}
  #allocation0 [shape = 'u32[]', space=smem, size = 0x4, offset = 0x4, fixed_abs, tag = 'smem constant byte address 0x4 - core index']
  #allocation1 [shape = 'u32[72,128]{1,0:T(1,128)}', space=vmem, size = 0x9000, scoped, tag = 'internal scratch']
  #allocation2 [shape = 'f32[1,32]{1,0:T(1,128)}', space=vmem, size = 0x200, scoped, tag = 'scratch operand']
  #allocation3 [shape = 'f32[1,32]{1,0:T(1,128)}', space=vmem, size = 0x200, scoped, tag = 'scratch operand']
  %s0 = inlined_call_operand.hbm [shape: f32[16,32], index: 0, kind: input, shape index: {}]
  %s1 = inlined_call_operand.hbm [shape: f32[1,32], index: 1, kind: input, shape index: {}]
  %s2 = inlined_call_operand.vmem [shape: f32[1,32], index: 2, kind: input, shape index: {}]
  %s3 = inlined_call_operand.hbm [shape: f32[16,32], index: 3, kind: output, shape index: {}]
  %s4 = sld [smem:[#allocation0]]
  $region69: #{tpu_custom_call.1} parent=0
    _
  %s6 = ssub.s32 1, %s4
  %s7 = scalar_select 0, %s6, %s4
  $region1: #{tpu_custom_call.1} parent=0
    #allocation4 [shape = 'u8[8192]{0}', space=vmem, size = 0x2000, scoped, tag = 'input window, operand 0, single buffered']
    #allocation5 [shape = 's32[2]{0}', space=sflag, size = 0x8, scoped, tag = 'scoped memory for tpu_custom_call.1']
    #allocation6 [shape = 's32[2]{0}', space=sflag, size = 0x8, scoped, tag = 'scoped memory for tpu_custom_call.1']
    #allocation7 [shape = 'u8[512]{0}', space=vmem, size = 0x400, scoped, tag = 'input window, operand 1, single buffered']
    #allocation8 [shape = 's32[1]{0}', space=sflag, size = 0x4, scoped, tag = 'scoped memory for tpu_custom_call.1']
    #allocation9 [shape = 'u8[16384]{0}', space=vmem, size = 0x4000, scoped, tag = 'output window, operand 0']
    %8 = vsyncpa [#allocation5], 0
    %9 = vsyncpa [#allocation8], 0
    %10 = vsyncpa [#allocation6], 0
    %s11 = scalar_lea.sflag [#allocation6], 1
    %12 = vsyncpa %s11, 0
    loop: start=0, step=1, limit=4
    $region2: #{tpu_custom_call.1} parent=1 // loop_pre_header
      _
    $region3: #{tpu_custom_call.1} parent=1 // loop_header
      %s14 = sphi 0, %s18
      %p15 = scmp.ge.s32.totalorder %s14, 4
      %s21 = sphi 0, %s33
      %s22 = sphi 0, %s29
      %s23 = sphi 0, %s21
      %s24 = sphi 0, %s22
      %s25 = sphi 0, %s23
      %s26 = sphi 0, %s24
      %s36 = sphi 0, %s38
      %s39 = sphi 0, %s36
      %s40 = sphi 0, %s39
      %s56 = sphi 0, %s40
      %s60 = sphi 0, %s60
      %s62 = sphi 0, %s60
      %s63 = sphi 0, %s62
      %s77 = sphi 0, %s63
      %s81 = sphi 0, %s81
      %s83 = sphi 0, %s81
      %s84 = sphi 0, %s83
      %s98 = sphi 0, %s84
      %s106 = sphi 0, %s108
      %s109 = sphi 0, %s106
      %s110 = sphi 0, %s109
      %s126 = sphi 0, %s110
    $region4: #{tpu_custom_call.1} parent=1 // loop_header_branch
      %17 = sbr.rel (%p15) target = $region8
    $region5: #{tpu_custom_call.1} parent=1 // loop_body
      %s19 = ssub.s32 %s14, 1
      %s20 = ssub.s32 %s14, 2
      %s27 = sadd.s32 1, %s22
      %p28 = scmp.ge.s32.totalorder %s27, 1
      %s29 = scalar_select %p28, 0, %s27
      %s30 = sadd.s32 1, %s21
      %s31 = scalar_select %p28, %s30, %s21
      %p32 = scmp.ge.s32.totalorder %s31, 2
      %s33 = scalar_select %p32, 0, %s31
      %s34 = ssub.s32 %s22, %s29
      %p35 = scmp.eq.s32.totalorder %s34, 0
      %s37 = sadd.s32 %s36, 1
      %s38 = scalar_select %p35, %s36, %s37
      %p41 = pneg %p35
      %p42 = scmp.eq.s32.totalorder %s14, 1
      %p43 = por %p41, %p42
      %p44 = scmp.ne.s32.totalorder %s36, %s39
      %p45 = scmp.eq.s32.totalorder %s14, 0
      %p46 = por %p44, %p45
      %p47 = scmp.ne.s32.totalorder %s36, %s39
      %p48 = scmp.eq.s32.totalorder %s19, 1
      %p49 = por %p47, %p48
      %p50 = scmp.ne.s32.totalorder %s39, %s40
      %p51 = scmp.eq.s32.totalorder %s19, 0
      %p52 = por %p50, %p51
      %p53 = scmp.ne.s32.totalorder %s39, %s40
      %p54 = scmp.eq.s32.totalorder %s20, 1
      %p55 = por %p53, %p54
      %p57 = scmp.ne.s32.totalorder %s40, %s56
      %p58 = scmp.eq.s32.totalorder %s20, 0
      %p59 = por %p57, %p58
      %s61 = sadd.s32 %s60, 1
      %p64 = scmp.eq.s32.totalorder %s14, 1
      %p65 = scmp.ne.s32.totalorder %s60, %s62
      %p66 = scmp.eq.s32.totalorder %s14, 0
      %p67 = por %p65, %p66
      %p68 = scmp.ne.s32.totalorder %s60, %s62
      %p69 = scmp.eq.s32.totalorder %s19, 1
      %p70 = por %p68, %p69
      %p71 = scmp.ne.s32.totalorder %s62, %s63
      %p72 = scmp.eq.s32.totalorder %s19, 0
      %p73 = por %p71, %p72
      %p74 = scmp.ne.s32.totalorder %s62, %s63
      %p75 = scmp.eq.s32.totalorder %s20, 1
      %p76 = por %p74, %p75
      %p78 = scmp.ne.s32.totalorder %s63, %s77
      %p79 = scmp.eq.s32.totalorder %s20, 0
      %p80 = por %p78, %p79
      %s82 = sadd.s32 %s81, 1
      %p85 = scmp.eq.s32.totalorder %s14, 1
      %p86 = scmp.ne.s32.totalorder %s81, %s83
      %p87 = scmp.eq.s32.totalorder %s14, 0
      %p88 = por %p86, %p87
      %p89 = scmp.ne.s32.totalorder %s81, %s83
      %p90 = scmp.eq.s32.totalorder %s19, 1
      %p91 = por %p89, %p90
      %p92 = scmp.ne.s32.totalorder %s83, %s84
      %p93 = scmp.eq.s32.totalorder %s19, 0
      %p94 = por %p92, %p93
      %p95 = scmp.ne.s32.totalorder %s83, %s84
      %p96 = scmp.eq.s32.totalorder %s20, 1
      %p97 = por %p95, %p96
      %p99 = scmp.ne.s32.totalorder %s84, %s98
      %p100 = scmp.eq.s32.totalorder %s20, 0
      %p101 = por %p99, %p100
      %s102 = smul.u32 %s21, %s22
      %s103 = smul.u32 %s33, %s29
      %s104 = ssub.s32 %s102, %s103
      %p105 = scmp.eq.s32.totalorder %s104, 0
      %s107 = sadd.s32 %s106, 1
      %s108 = scalar_select %p105, %s106, %s107
      %p111 = pneg %p105
      %p112 = scmp.eq.s32.totalorder %s14, 1
      %p113 = por %p111, %p112
      %p114 = scmp.ne.s32.totalorder %s106, %s109
      %p115 = scmp.eq.s32.totalorder %s14, 0
      %p116 = por %p114, %p115
      %p117 = scmp.ne.s32.totalorder %s106, %s109
      %p118 = scmp.eq.s32.totalorder %s19, 1
      %p119 = por %p117, %p118
      %p120 = scmp.ne.s32.totalorder %s109, %s110
      %p121 = scmp.eq.s32.totalorder %s19, 0
      %p122 = por %p120, %p121
      %p123 = scmp.ne.s32.totalorder %s109, %s110
      %p124 = scmp.eq.s32.totalorder %s20, 1
      %p125 = por %p123, %p124
      %p127 = scmp.ne.s32.totalorder %s110, %s126
      %p128 = scmp.eq.s32.totalorder %s20, 0
      %p129 = por %p127, %p128
      %p130 = scmp.le.s32.totalorder 1, %s14
      %p131 = scmp.lt.s32.totalorder %s14, 3
      %p132 = pnand %p130, %p131
      %p133 = pneg %p132
      // Predicated region
      $region9: #{tpu_custom_call.1} parent=5 // pred_check
        _
      $region10: #{tpu_custom_call.1} parent=5 // pred_check_branch
        %135 = sbr.rel (%p132) target = $region12
      $region11: #{tpu_custom_call.1} parent=5 // pred_region
        %s136 = ssub.s32 %s14, 1
        // Predicated region
        $region13: #{tpu_custom_call.1} parent=11 // pred_check
          %p137 = pneg %p52
        $region14: #{tpu_custom_call.1} parent=11 // pred_check_branch
          %139 = sbr.rel (%p137) target = $region16
        $region15: #{tpu_custom_call.1} parent=11 // pred_region
          %s140 = smul.u32 2, %s24
          %142 = vsyncadd [#allocation5], 0
          %s143 = smul.addr %s140, 8
          %s144 = scalar_lea.hbm %s0, %s143
          %s145 = sshll.u32 %s144, 4
          %s146 = int_to_ptr.hbm [resolvable:$true] %s145
          %s147 = sshll.u32 [#allocation4], 4
          %s148 = int_to_ptr.vmem [resolvable:$true] %s147
          %153 = dma.hbm_to_vmem [thread:$0]  %s146, 256, %s148, [#allocation5], 128, 128, 8
        $region16: #{tpu_custom_call.1} parent=11 // pred_fallthru
          _
        // Predicated region
        $region17: #{tpu_custom_call.1} parent=11 // pred_check
          %p154 = pneg %p73
        $region18: #{tpu_custom_call.1} parent=11 // pred_check_branch
          %156 = sbr.rel (%p154) target = $region20
        $region19: #{tpu_custom_call.1} parent=11 // pred_region
          %158 = vsyncadd [#allocation8], 0
          %s160 = sshll.u32 %s1, 4
          %s161 = int_to_ptr.hbm [resolvable:$true] %s160
          %s162 = sshll.u32 [#allocation7], 4
          %s163 = int_to_ptr.vmem [resolvable:$true] %s162
          %165 = dma.hbm_to_vmem [thread:$0]  %s161, 16, %s163, [#allocation8]
        $region20: #{tpu_custom_call.1} parent=11 // pred_fallthru
          _
        // Predicated region
        $region21: #{tpu_custom_call.1} parent=11 // pred_check
          %p166 = pneg %p94
        $region22: #{tpu_custom_call.1} parent=11 // pred_check_branch
          %168 = sbr.rel (%p166) target = $region24
        $region23: #{tpu_custom_call.1} parent=11 // pred_region
          _
        $region24: #{tpu_custom_call.1} parent=11 // pred_fallthru
          _
      $region12: #{tpu_custom_call.1} parent=5 // pred_fallthru
        _
      %p169 = scmp.lt.s32.totalorder %s14, 2
      // Predicated region
      $region25: #{tpu_custom_call.1} parent=5 // pred_check
        %p170 = pneg %p169
      $region26: #{tpu_custom_call.1} parent=5 // pred_check_branch
        %172 = sbr.rel (%p170) target = $region28
      $region27: #{tpu_custom_call.1} parent=5 // pred_region
        _
      $region28: #{tpu_custom_call.1} parent=5 // pred_fallthru
        _
      %p173 = scmp.le.s32.totalorder 1, %s14
      %p174 = scmp.lt.s32.totalorder %s14, 3
      %p175 = pnand %p173, %p174
      %p176 = pneg %p175
      // Predicated region
      $region29: #{tpu_custom_call.1} parent=5 // pred_check
        _
      $region30: #{tpu_custom_call.1} parent=5 // pred_check_branch
        %178 = sbr.rel (%p175) target = $region32
      $region31: #{tpu_custom_call.1} parent=5 // pred_region
        %s179 = ssub.s32 %s14, 1
        // Predicated region
        $region33: #{tpu_custom_call.1} parent=31 // pred_check
          %p180 = pneg %p52
        $region34: #{tpu_custom_call.1} parent=31 // pred_check_branch
          %182 = sbr.rel (%p180) target = $region36
        $region35: #{tpu_custom_call.1} parent=31 // pred_region
          %184 = dma.done [#allocation5], 256
        $region36: #{tpu_custom_call.1} parent=31 // pred_fallthru
          _
        // Predicated region
        $region37: #{tpu_custom_call.1} parent=31 // pred_check
          %p185 = pneg %p73
        $region38: #{tpu_custom_call.1} parent=31 // pred_check_branch
          %187 = sbr.rel (%p185) target = $region40
        $region39: #{tpu_custom_call.1} parent=31 // pred_region
          %189 = dma.done [#allocation8], 16
        $region40: #{tpu_custom_call.1} parent=31 // pred_fallthru
          _
        %p190 = pneg %p52
        %p191 = pneg %p49
        %p192 = pneg %p73
        %p193 = pneg %p70
        %p194 = pneg %p94
        %p195 = pneg %p91
        %p196 = pneg %p122
        %p197 = pneg %p119
        %s198 = sand.u32 %s109, 1
        %s199 = scalar_lea.sflag [#allocation6], %s198
        %s200 = sand.u32 %s109, 1
        %s201 = smul.addr %s200, 16
        %s202 = scalar_lea.vmem [#allocation9], %s201
        %s203 = smul.u32 2, %s24
        %s204 = smul.u32 %s23, %s24
        %s205 = smul.u32 2, %s204
        %p206 = scmp.eq.s32.totalorder %s23, 0
        %p207 = scmp.eq.s32.totalorder %s24, 0
        %p208 = pnand %p206, %p207
        %p209 = pneg %p208
        // Predicated region
        $region41: #{tpu_custom_call.1} parent=31 // pred_check
          _
        $region42: #{tpu_custom_call.1} parent=31 // pred_check_branch
          %211 = sbr.rel (%p208) target = $region44
        $region43: #{tpu_custom_call.1} parent=31 // pred_region
          %vm212 = vcmask 253952
          %213 = vst.msk [vmem:[#allocation2] sm:$0x1] %vm212, 0.0
          %214 = vst.msk [vmem:[#allocation3] sm:$0x1] %vm212, 0.0
        $region44: #{tpu_custom_call.1} parent=31 // pred_fallthru
          _
        // Predicated region
        $region45: #{tpu_custom_call.1} parent=31 // pred_check
          %p215 = pneg %p206
        $region46: #{tpu_custom_call.1} parent=31 // pred_check_branch
          %217 = sbr.rel (%p215) target = $region48
        $region47: #{tpu_custom_call.1} parent=31 // pred_region
          %v218 = vld [vmem:[#allocation4] sm:$0xff]
          %v219 = vld [vmem:[#allocation4 + $0x8] sm:$0xff]
          %v220 = vld [vmem:[#allocation2] sm:$0x1]
          %vm221 = vcmask 261120
          %v222 = vsel %vm221, %v218, 0.0
          %v223 = vsel %vm221, %v219, 0.0
          %v224 = vadd.f32 %v222, %v223
          %v225 = vrot.slane %v224, 4
          %v226 = vadd.f32 %v224, %v225
          %v227 = vrot.slane %v226, 2
          %v228 = vadd.f32 %v226, %v227
          %v229 = vrot.slane %v228, 1
          %v230 = vadd.f32 %v228, %v229
          %v231 = vadd.f32 %v220, %v230
          %vm232 = vcmask 253952
          %233 = vst.msk [vmem:[#allocation2] sm:$0x1] %vm232, %v231
          %v234 = vld [vmem:[#allocation3] sm:$0x1]
          %v235 = vmul.f32 %v218, %v218
          %v236 = vmul.f32 %v219, %v219
          %v237 = vsel %vm221, %v235, 0.0
          %v238 = vsel %vm221, %v236, 0.0
          %v239 = vadd.f32 %v237, %v238
          %v240 = vrot.slane %v239, 4
          %v241 = vadd.f32 %v239, %v240
          %v242 = vrot.slane %v241, 2
          %v243 = vadd.f32 %v241, %v242
          %v244 = vrot.slane %v243, 1
          %v245 = vadd.f32 %v243, %v244
          %v246 = vadd.f32 %v234, %v245
          %247 = vst.msk [vmem:[#allocation3] sm:$0x1] %vm232, %v246
        $region48: #{tpu_custom_call.1} parent=31 // pred_fallthru
          _
        // Predicated region
        $region49: #{tpu_custom_call.1} parent=31 // pred_check
          _
        $region50: #{tpu_custom_call.1} parent=31 // pred_check_branch
          %249 = sbr.rel (%p208) target = $region52
        $region51: #{tpu_custom_call.1} parent=31 // pred_region
          %v250 = vld [vmem:[#allocation2] sm:$0x1]
          %v251 = vmul.f32 %v250, 0.0625
          %v252 = vld [vmem:[#allocation3] sm:$0x1]
          %v253 = vmul.f32 %v252, 0.0625
          %v254 = vmul.f32 %v251, %v251
          %v255 = vsub.f32 %v253, %v254
          %v256 = vmax.f32 %v255, 0.0
          %v257 = vadd.f32 %v256, 1e-05
          %v258 = vrsqrt.pop %v257
          %v259 = vmul.f32 %v258, %v257
          %v260 = vmul.f32 %v259, %v258
          %v261 = vmul.f32 0.5, %v260
          %v262 = vsub.f32 1.5, %v261
          %v263 = vmul.f32 %v258, %v262
          %vm264 = vweird.f32 %v257
          %vm265 = vweird.f32 %v258
          %vm266 = vmor %vm264, %vm265
          %v267 = vsel %vm266, %v258, %v263
          %v268 = vld [vmem:[#allocation7] sm:$0x1]
          %v269 = vmul.f32 %v268, %v267
          %vm270 = vcmask 253952
          %271 = vst.msk [vmem:[#allocation2] sm:$0x1] %vm270, %v269
          %v272 = vld [vmem:[%s2] sm:$0x1]
          %v273 = vmul.f32 %v251, %v269
          %v274 = vsub.f32 %v272, %v273
          %275 = vst.msk [vmem:[#allocation3] sm:$0x1] %vm270, %v274
        $region52: #{tpu_custom_call.1} parent=31 // pred_fallthru
          _
        %p276 = scmp.eq.s32.totalorder %s23, 1
        // Predicated region
        $region53: #{tpu_custom_call.1} parent=31 // pred_check
          %p277 = pneg %p276
        $region54: #{tpu_custom_call.1} parent=31 // pred_check_branch
          %279 = sbr.rel (%p277) target = $region56
        $region55: #{tpu_custom_call.1} parent=31 // pred_region
          %v280 = vld [vmem:[#allocation4] sm:$0xff]
          %v281 = vld [vmem:[#allocation4 + $0x8] sm:$0xff]
          %v282 = vld [vmem:[#allocation2] sm:$0x1]
          %v284 = vperm.slane %v282, 0
          %v286 = vmul.f32 %v280, %v284
          %v287 = vmul.f32 %v281, %v284
          %v288 = vld [vmem:[#allocation3] sm:$0x1]
          %v290 = vperm.slane %v288, 0
          %v292 = vadd.f32 %v286, %v290
          %v293 = vadd.f32 %v287, %v290
          %vm294 = vcmask 261120
          %295 = vst.msk [vmem:[%s202] sm:$0xff] %vm294, %v292
          %296 = vst.msk [vmem:[%s202 + $0x8] sm:$0xff] %vm294, %v293
        $region56: #{tpu_custom_call.1} parent=31 // pred_fallthru
          _
        %s297 = sand.u32 %s109, 1
        %s298 = scalar_lea.sflag [#allocation6], %s297
        %s299 = sand.u32 %s109, 1
        %s300 = smul.addr %s299, 16
        %s301 = scalar_lea.vmem [#allocation9], %s300
        // Predicated region
        $region57: #{tpu_custom_call.1} parent=31 // pred_check
          %p302 = pneg %p119
        $region58: #{tpu_custom_call.1} parent=31 // pred_check_branch
          %304 = sbr.rel (%p302) target = $region60
        $region59: #{tpu_custom_call.1} parent=31 // pred_region
          %s305 = smul.u32 %s23, %s24
          %s306 = smul.u32 2, %s305
          %308 = vsyncadd %s298, 0
          %s309 = smul.addr %s306, 8
          %s310 = scalar_lea.hbm %s3, %s309
          %s311 = sshll.u32 %s301, 4
          %s312 = int_to_ptr.vmem [resolvable:$true] %s311
          %s313 = sshll.u32 %s310, 4
          %s314 = int_to_ptr.hbm [resolvable:$true] %s313
          %319 = dma.vmem_to_hbm [thread:$0]  %s312, 256, %s314, %s298, 128, 128, 8
        $region60: #{tpu_custom_call.1} parent=31 // pred_fallthru
          _
      $region32: #{tpu_custom_call.1} parent=5 // pred_fallthru
        _
      %p320 = scmp.le.s32.totalorder 2, %s14
      // Predicated region
      $region61: #{tpu_custom_call.1} parent=5 // pred_check
        %p321 = pneg %p320
      $region62: #{tpu_custom_call.1} parent=5 // pred_check_branch
        %323 = sbr.rel (%p321) target = $region64
      $region63: #{tpu_custom_call.1} parent=5 // pred_region
        %s324 = ssub.s32 %s14, 2
        // Predicated region
        $region65: #{tpu_custom_call.1} parent=63 // pred_check
          %p325 = pneg %p125
        $region66: #{tpu_custom_call.1} parent=63 // pred_check_branch
          %327 = sbr.rel (%p325) target = $region68
        $region67: #{tpu_custom_call.1} parent=63 // pred_region
          %s328 = sand.u32 %s110, 1
          %s329 = scalar_lea.sflag [#allocation6], %s328
          %s330 = sand.u32 %s110, 1
          %s331 = smul.addr %s330, 16
          %s332 = scalar_lea.vmem [#allocation9], %s331
          %334 = dma.done %s329, 256
        $region68: #{tpu_custom_call.1} parent=63 // pred_fallthru
          _
      $region64: #{tpu_custom_call.1} parent=5 // pred_fallthru
        _
    $region6: #{tpu_custom_call.1} parent=1 // loop_footer
      %s18 = sadd.s32 1, %s14
    $region7: #{tpu_custom_call.1} parent=1 // loop_footer_branch
      %13 = sbr.rel target = $region3
    $region8: #{tpu_custom_call.1} parent=1 // loop_exit
      _
    %335 = vsyncpa [#allocation5], 1
    %s336 = scalar_lea.sflag [#allocation5], 1
    %337 = vsyncpa %s336, 1
    %338 = vsyncpa [#allocation8], 1
    %339 = vsyncpa [#allocation6], 1
    %s340 = scalar_lea.sflag [#allocation6], 1
    %341 = vsyncpa %s340, 1

</llo_original>
